<compile_context>
chip_gen: v7x
topology: tpu7x:2x2x1
jax: 0.10.0
libtpu: 0.0.40
codegen_flags: <defaults>
</compile_context>

<pallas_src>
import functools

import jax
import jax.numpy as jnp
from jax.experimental import pallas as pl
from jax.experimental.pallas import tpu as pltpu

# ----------------------- config (mirrors the torch config) -----------------------
N_EMBD = 32
N_HIDDEN = 4 * N_EMBD          # 128
N_EXPERTS = 4
TOPK = 2
USE_BIAS = True
W_IMPORTANCE = 0.01
W_LOAD = 0.01
LAMBDA_Z = 0.001
W_PENALTY = 0.01


# ------------------------------ helpers -------------------------------------------
def _pick_tile_t(T, cap=512):
    """Largest 8-aligned divisor of T <= cap; prefer grid >= 2 (v7x megacore)."""
    divs = [t for t in range(8, T + 1, 8) if T % t == 0]
    if not divs:
        return T
    capped = [t for t in divs if t <= cap] or [min(divs)]
    multi = [t for t in capped if T // t >= 2]
    return max(multi) if multi else max(capped)


def _pad_rows(a, mult=8):
    """Zero-pad the leading (token) axis up to a multiple of `mult`."""
    T = a.shape[0]
    Tp = pl.cdiv(T, mult) * mult
    if Tp == T:
        return a
    return jnp.pad(a, ((0, Tp - T),) + ((0, 0),) * (a.ndim - 1))


# -------------------- one-time parameter packing (hoisted out of forward) ---------
def prepare_params(raw):
    """Pack raw (torch-layout) params into kernel-ready bf16/padded slabs, once."""
    E, D, H = raw["w1"].shape
    EH = E * H
    Dp = pl.cdiv(D, 128) * 128                 # lane-dense expert-output width
    Rp = pl.cdiv(2 * E, 128) * 128             # lane-dense router-output width

    packed = dict(raw)
    w_router = jnp.concatenate([raw["wg"], raw["wn"]], axis=1)          # (D, 2E)
    packed["w_router"] = jnp.pad(
        w_router, ((0, 0), (0, Rp - 2 * E))).astype(jnp.bfloat16)       # (D, Rp)
    packed["w1_all"] = jnp.transpose(raw["w1"], (1, 0, 2)).reshape(
        D, EH).astype(jnp.bfloat16)                                     # (D, E*H)
    packed["b1_all"] = raw["b1"].reshape(1, EH).astype(jnp.float32)     # (1, E*H)
    packed["w2_all"] = jnp.pad(raw["w2"].reshape(EH, D),
                               ((0, 0), (0, Dp - D))).astype(jnp.bfloat16)  # (E*H, Dp)
    packed["b2_pad"] = jnp.pad(raw["b2"],
                               ((0, 0), (0, Dp - D))).astype(jnp.float32)   # (E, Dp)
    return packed


# ----------------------------- Pallas kernels ------------------------------------
def router_kernel(x_ref, w_ref, o_ref):
    # fused lane-dense projection: [gate_logits | noise_logits | 0-pad] = x @ [Wg|Wn|0]
    o_ref[...] = jnp.dot(x_ref[...].astype(jnp.bfloat16), w_ref[...],
                         preferred_element_type=jnp.float32)


def router(x2, w_router_packed, n_experts):
    """Returns (gate_logits, noise_logits) from a single token-tiled pallas_call."""
    T, D = x2.shape
    Rp = w_router_packed.shape[1]
    x2p = _pad_rows(x2)
    Tp = x2p.shape[0]
    tile_t = _pick_tile_t(Tp)
    out = pl.pallas_call(
        router_kernel,
        out_shape=jax.ShapeDtypeStruct((Tp, Rp), jnp.float32),
        grid_spec=pltpu.PrefetchScalarGridSpec(
            num_scalar_prefetch=0, grid=(Tp // tile_t,),
            in_specs=[pl.BlockSpec((tile_t, D), lambda i: (i, 0)),
                      pl.BlockSpec((D, Rp), lambda i: (0, 0))],
            out_specs=pl.BlockSpec((tile_t, Rp), lambda i: (i, 0))),
        compiler_params=pltpu.CompilerParams(
            dimension_semantics=("parallel",)),
    )(x2p, w_router_packed)
    return out[:T, :n_experts], out[:T, n_experts:2 * n_experts]


def moe_fused_kernel(x_ref, w1_ref, b1_ref, w2_ref, b2_ref, gw_ref, o_ref, *,
                     n_experts, n_hidden):
    # x  : (tt, D)    f32        w1 : (D, E*H)   bf16     b1 : (1, E*H)  f32
    # w2 : (E*H, Dp)  bf16       b2 : (E, Dp)    f32      gw : (tt, E)   f32
    x = x_ref[...].astype(jnp.bfloat16)
    h = jnp.dot(x, w1_ref[...], preferred_element_type=jnp.float32)
    # f32 tanh-GELU == torch nn.GELU(approximate='tanh')
    h = jax.nn.gelu(h + b1_ref[...], approximate=True)

    gw = gw_ref[...]                                       # (tt, E), f32
    # gate scaling: E unrolled lane-broadcast multiplies over static 128-lane
    # H-chunks (replaces the old E*H-redundant (T, E*H) gw_rep DMA stream)
    h_scaled = jnp.concatenate(
        [h[:, e * n_hidden:(e + 1) * n_hidden] * gw[:, e:e + 1]
         for e in range(n_experts)], axis=1).astype(jnp.bfloat16)

    y = jnp.dot(h_scaled, w2_ref[...], preferred_element_type=jnp.float32)
    # gated second-layer bias: E unrolled VPU FMAs (was a K=E matmul)
    for e in range(n_experts):
        y = y + gw[:, e:e + 1] * b2_ref[e:e + 1, :]
    o_ref[...] = y


def moe_experts(x2, gw, packed, *, tile_t=None):
    T, D = x2.shape
    w1_all, b1_all = packed["w1_all"], packed["b1_all"]
    w2_all, b2_pad = packed["w2_all"], packed["b2_pad"]
    EH = w1_all.shape[1]
    E, Dp = b2_pad.shape
    H = EH // E

    x2p = _pad_rows(x2)
    gwp = _pad_rows(gw.astype(jnp.float32))
    Tp = x2p.shape[0]
    if tile_t is None:
        tile_t = _pick_tile_t(Tp)

    # Rough VMEM need: double-buffered grid-varying streams + grid-invariant
    # weight slabs (x2, over-counted; weights actually double-buffered too by
    # default) + f32 intermediates headroom.
    vmem_est = (2 * (tile_t * D * 4 + tile_t * E * 4 + tile_t * Dp * 4)
                + 2 * (w1_all.size * 2 + b1_all.size * 4
                       + w2_all.size * 2 + b2_pad.size * 4)
                + 4 * tile_t * EH * 4)
    cparams = {"dimension_semantics": ("parallel",)}       # token tiles -> megacore
    if vmem_est > 32 * 1024 * 1024:
        # TODO(synk): re-derive tile_t per generation (v7x has 64 MiB physical VMEM).
        cparams["vmem_limit_bytes"] = int(min(64 * 1024 * 1024, 1.5 * vmem_est))

    # TODO(synk): weight slabs are grid-invariant; single-buffer them
    # (pipeline_mode=pl.Buffered(1)) once validated on the target jax version.
    out = pl.pallas_call(
        functools.partial(moe_fused_kernel, n_experts=E, n_hidden=H),
        out_shape=jax.ShapeDtypeStruct((Tp, Dp), jnp.float32),
        grid_spec=pltpu.PrefetchScalarGridSpec(
            num_scalar_prefetch=0, grid=(Tp // tile_t,),
            in_specs=[pl.BlockSpec((tile_t, D), lambda i: (i, 0)),
                      pl.BlockSpec((D, EH), lambda i: (0, 0)),
                      pl.BlockSpec((1, EH), lambda i: (0, 0)),
                      pl.BlockSpec((EH, Dp), lambda i: (0, 0)),
                      pl.BlockSpec((E, Dp), lambda i: (0, 0)),
                      pl.BlockSpec((tile_t, E), lambda i: (i, 0))],
            out_specs=pl.BlockSpec((tile_t, Dp), lambda i: (i, 0))),
        compiler_params=pltpu.CompilerParams(**cparams),
    )(x2p, w1_all, b1_all, w2_all, b2_pad, gwp)
    return out[:T, :D]


# -------------------------------- forward ----------------------------------------
def olnn_moe_forward(params, x, noise_key):
    B, S, D = x.shape
    E = N_EXPERTS
    x2 = x.reshape(-1, D)
    T = x2.shape[0]

    gate_logits_pre, noise_pre = router(x2, params["w_router"], E)

    aux = jnp.float32(0.0)

    if W_PENALTY > 0:
        p = jax.nn.softmax(gate_logits_pre / 1.66, axis=-1)
        penalty_a = jnp.mean(p * (1.0 - p))
        pm = p.mean(axis=0)
        penalty_b = 1.0 / E - jnp.mean(pm * (1.0 - pm))
        aux = aux + (penalty_a + penalty_b) * W_PENALTY

    if LAMBDA_Z > 0:
        lse = jax.nn.logsumexp(gate_logits_pre, axis=-1)
        aux = aux + LAMBDA_Z * jnp.mean(lse ** 2)

    # noisy gating:  logits += N(0,1) * softplus(noise_layer(x))  (+ bias)
    noise_std = jax.nn.softplus(noise_pre)
    gate_logits = gate_logits_pre + jax.random.normal(
        noise_key, gate_logits_pre.shape, dtype=jnp.float32) * noise_std
    if params["bias"] is not None:
        gate_logits = gate_logits + params["bias"]

    top_vals, selected = jax.lax.top_k(gate_logits, TOPK)        # (T, K)
    weights = jax.nn.softmax(top_vals.astype(jnp.float32), axis=1).astype(x.dtype)

    if W_IMPORTANCE > 0:
        importance = jnp.zeros((E,), weights.dtype).at[
            selected.reshape(-1)].add(weights.reshape(-1))
        cv2 = jnp.var(importance) / (jnp.mean(importance) ** 2)
        aux = aux + W_IMPORTANCE * cv2

    if W_LOAD > 0:
        router_probs = jax.nn.softmax(
            gate_logits.astype(jnp.float32), axis=-1).astype(x.dtype)
        top1 = selected[:, 0]
        P_i = router_probs.mean(axis=0)
        fi = jnp.bincount(top1, length=E).astype(jnp.float32) / top1.shape[0]
        aux = aux + W_LOAD * E * jnp.sum(fi * P_i)

    # buffer-update equivalent of self.total_assigment_count (statistics only)
    assignment_count = jnp.bincount(selected[:, 0], length=E)

    # dense (T, E) gate-weight matrix: weight of expert e for token t (0 if unused)
    gw = jnp.zeros((T, E), x.dtype).at[
        jnp.arange(T)[:, None], selected].add(weights)

    results = moe_experts(x2, gw, params)
    return results.reshape(x.shape), aux, assignment_count


# ----------------------------- reference (pure JAX) -------------------------------
def ref_experts(x2, w1, b1, w2, b2, gw):
    """Mirrors the kernel's bf16-input / f32-accumulate dtype choices."""
    out = jnp.zeros_like(x2)
    xb = x2.astype(jnp.bfloat16)
    for e in range(N_EXPERTS):
        h = jnp.dot(xb, w1[e].astype(jnp.bfloat16),
                    preferred_element_type=jnp.float32) + b1[e]
        h = jax.nn.gelu(h, approximate=True)
        h = (h * gw[:, e:e + 1]).astype(jnp.bfloat16)
        y = jnp.dot(h, w2[e].astype(jnp.bfloat16),
                    preferred_element_type=jnp.float32) + gw[:, e:e + 1] * b2[e]
        out = out + y
    return out


# ----------------------------------- main -----------------------------------------
if __name__ == "__main__":
    key = jax.random.PRNGKey(0)
    ks = jax.random.split(key, 10)

    B, S, D, H, E = 2, 8, N_EMBD, N_HIDDEN, N_EXPERTS

    raw_params = {
        "wg": 0.02 * jax.random.normal(ks[0], (D, E), jnp.float32),
        "wn": 0.02 * jax.random.normal(ks[1], (D, E), jnp.float32),
        "bias": jnp.zeros((E,), jnp.float32) if USE_BIAS else None,
        "w1": 0.02 * jax.random.normal(ks[2], (E, D, H), jnp.float32),
        "b1": 0.02 * jax.random.normal(ks[6], (E, H), jnp.float32),
        "w2": 0.02 * jax.random.normal(ks[3], (E, H, D), jnp.float32),
        "b2": 0.02 * jax.random.normal(ks[7], (E, D), jnp.float32),
    }
    params = prepare_params(raw_params)        # one-time packing (hoisted)

    x = jax.random.normal(ks[4], (B, S, D), jnp.float32)
    noise_key = ks[5]

    out, aux_loss, counts = olnn_moe_forward(params, x, noise_key)
    out = jax.block_until_ready(out)
    aux_loss = jax.block_until_ready(aux_loss)

    # numerical sanity check of the fused Pallas expert path against pure JAX
    x2 = x.reshape(-1, D)
    T = x2.shape[0]
    gl_pre, np_pre = router(x2, params["w_router"], E)
    gl = gl_pre + jax.random.normal(noise_key, gl_pre.shape) * jax.nn.softplus(np_pre)
    if params["bias"] is not None:
        gl = gl + params["bias"]
    tv, sel = jax.lax.top_k(gl, TOPK)
    w = jax.nn.softmax(tv, axis=1)
    gw = jnp.zeros((T, E), jnp.float32).at[
        jnp.arange(T)[:, None], sel].add(w)
    ref = ref_experts(x2, raw_params["w1"], raw_params["b1"],
                      raw_params["w2"], raw_params["b2"], gw).reshape(x.shape)
    assert jnp.allclose(out, ref, atol=2e-5, rtol=1e-4), "mismatch vs reference"
    assert out.shape == x.shape and bool(jnp.isfinite(aux_loss))
    assert int(counts.sum()) == T

    print("KERNEL_OK")
</pallas_src>

<mosaic_0001>
module attributes {stable_mosaic.version = 11 : i64} {
  func.func @router_kernel(%arg0: i32, %arg1: memref<8x32xf32, #tpu.memory_space<vmem>>, %arg2: memref<32x128xbf16, #tpu.memory_space<vmem>>, %arg3: memref<8x128xf32, #tpu.memory_space<vmem>>) attributes {dimension_semantics = [#tpu.dimension_semantics<parallel>], iteration_bounds = array<i64: 2>, scalar_prefetch = 0 : i64, scratch_operands = 0 : i64, tpu.core_type = #tpu.core_type<tc>, window_params = [{transform_indices = @transform_0, window_bounds = array<i64: 8, 32>}, {pipeline_mode = #tpu.pipeline_mode<synchronous>, transform_indices = @transform_1, window_bounds = array<i64: 32, 128>}, {transform_indices = @transform_2, window_bounds = array<i64: 8, 128>}]} {
    %c0 = arith.constant 0 : index
    %c0_0 = arith.constant 0 : index
    %0 = vector.load %arg1[%c0, %c0_0] : memref<8x32xf32, #tpu.memory_space<vmem>>, vector<8x32xf32>
    %1 = arith.truncf %0 : vector<8x32xf32> to vector<8x32xbf16>
    %c0_1 = arith.constant 0 : index
    %c0_2 = arith.constant 0 : index
    %2 = vector.load %arg2[%c0_1, %c0_2] : memref<32x128xbf16, #tpu.memory_space<vmem>>, vector<32x128xbf16>
    %cst = arith.constant dense<0.000000e+00> : vector<8x128xf32>
    %3 = tpu.matmul %1, %2, %cst {dimension_numbers = #tpu.dot_dimension_numbers<[1], [0], [0], [1], [0, 0, 1, 1], [], []>} : vector<8x32xbf16>, vector<32x128xbf16>, vector<8x128xf32> -> vector<8x128xf32>
    %c0_3 = arith.constant 0 : index
    %c0_4 = arith.constant 0 : index
    %4 = vector.load %arg3[%c0_3, %c0_4] : memref<8x128xf32, #tpu.memory_space<vmem>>, vector<8x128xf32>
    tpu.vector_store %arg3[%c0_3, %c0_4], %3 {strides = array<i32>} : memref<8x128xf32, #tpu.memory_space<vmem>>, vector<8x128xf32>,
    return
  }
  func.func @transform_0(%arg0: i32) -> (i32, i32) {
    %c0_i32 = arith.constant 0 : i32
    %c0_i32_0 = arith.constant 0 : i32
    return %arg0, %c0_i32 : i32, i32
  }
  func.func @transform_1(%arg0: i32) -> (i32, i32) {
    %c0_i32 = arith.constant 0 : i32
    %c0_i32_0 = arith.constant 0 : i32
    %c0_i32_1 = arith.constant 0 : i32
    return %c0_i32, %c0_i32_0 : i32, i32
  }
  func.func @transform_2(%arg0: i32) -> (i32, i32) {
    %c0_i32 = arith.constant 0 : i32
    %c0_i32_0 = arith.constant 0 : i32
    return %arg0, %c0_i32 : i32, i32
  }
}

</mosaic_0001>

<llo_original>
// kernel: tpu_custom_call.1
$region0: #{tpu_custom_call.1}
  #allocation0 [shape = 'u32[]', space=smem, size = 0x4, offset = 0x4, fixed_abs, tag = 'smem constant byte address 0x4 - core index']
  #allocation1 [shape = 'u32[144,128]{1,0:T(1,128)}', space=vmem, size = 0x12000, scoped, tag = 'internal scratch']
  %s0 = inlined_call_operand.hbm [shape: f32[16,32], index: 0, kind: input, shape index: {}]
  %s1 = inlined_call_operand.hbm [shape: bf16[32,128], index: 1, kind: input, shape index: {}]
  %s2 = inlined_call_operand.hbm [shape: f32[16,128], index: 2, kind: output, shape index: {}]
  %s3 = sld [smem:[#allocation0]]
  $region49: #{tpu_custom_call.1} parent=0
    _
  %s5 = ssub.s32 1, %s3
  %s6 = scalar_select 0, %s5, %s3
  $region1: #{tpu_custom_call.1} parent=0
    #allocation2 [shape = 'u8[8192]{0}', space=vmem, size = 0x2000, scoped, tag = 'input window, operand 0']
    #allocation3 [shape = 's32[2]{0}', space=sflag, size = 0x8, scoped, tag = 'scoped memory for tpu_custom_call.1']
    #allocation4 [shape = 's32[2]{0}', space=sflag, size = 0x8, scoped, tag = 'scoped memory for tpu_custom_call.1']
    #allocation5 [shape = 'u8[8192]{0}', space=vmem, size = 0x2000, scoped, tag = 'input window, operand 1, single buffered']
    #allocation6 [shape = 's32[1]{0}', space=sflag, size = 0x4, scoped, tag = 'scoped memory for tpu_custom_call.1']
    #allocation7 [shape = 'u8[8192]{0}', space=vmem, size = 0x2000, scoped, tag = 'output window, operand 0']
    %7 = vsyncpa [#allocation3], 0
    %s8 = scalar_lea.sflag [#allocation3], 1
    %9 = vsyncpa %s8, 0
    %10 = vsyncpa [#allocation6], 0
    %11 = vsyncpa [#allocation4], 0
    %s12 = scalar_lea.sflag [#allocation4], 1
    %13 = vsyncpa %s12, 0
    loop: start=0, step=1, limit=4
    $region2: #{tpu_custom_call.1} parent=1 // loop_pre_header
      _
    $region3: #{tpu_custom_call.1} parent=1 // loop_header
      %s15 = sphi 0, %s19
      %p16 = scmp.ge.s32.totalorder %s15, 4
      %s25 = sphi 0, %s27
      %s28 = sphi 0, %s25
      %s29 = sphi 0, %s28
      %s45 = sphi 0, %s29
      %s49 = sphi 0, %s49
      %s51 = sphi 0, %s49
      %s52 = sphi 0, %s51
      %s66 = sphi 0, %s52
      %s72 = sphi 0, %s74
      %s75 = sphi 0, %s72
      %s76 = sphi 0, %s75
      %s92 = sphi 0, %s76
    $region4: #{tpu_custom_call.1} parent=1 // loop_header_branch
      %18 = sbr.rel (%p16) target = $region8
    $region5: #{tpu_custom_call.1} parent=1 // loop_body
      %s20 = ssub.s32 %s15, 1
      %s21 = ssub.s32 %s15, 2
      %s22 = sadd.s32 %s15, 1
      %s23 = ssub.s32 %s15, %s22
      %p24 = scmp.eq.s32.totalorder %s23, 0
      %s26 = sadd.s32 %s25, 1
      %s27 = scalar_select %p24, %s25, %s26
      %p30 = pneg %p24
      %p31 = scmp.eq.s32.totalorder %s15, 1
      %p32 = por %p30, %p31
      %p33 = scmp.ne.s32.totalorder %s25, %s28
      %p34 = scmp.eq.s32.totalorder %s15, 0
      %p35 = por %p33, %p34
      %p36 = scmp.ne.s32.totalorder %s25, %s28
      %p37 = scmp.eq.s32.totalorder %s20, 1
      %p38 = por %p36, %p37
      %p39 = scmp.ne.s32.totalorder %s28, %s29
      %p40 = scmp.eq.s32.totalorder %s20, 0
      %p41 = por %p39, %p40
      %p42 = scmp.ne.s32.totalorder %s28, %s29
      %p43 = scmp.eq.s32.totalorder %s21, 1
      %p44 = por %p42, %p43
      %p46 = scmp.ne.s32.totalorder %s29, %s45
      %p47 = scmp.eq.s32.totalorder %s21, 0
      %p48 = por %p46, %p47
      %s50 = sadd.s32 %s49, 1
      %p53 = scmp.eq.s32.totalorder %s15, 1
      %p54 = scmp.ne.s32.totalorder %s49, %s51
      %p55 = scmp.eq.s32.totalorder %s15, 0
      %p56 = por %p54, %p55
      %p57 = scmp.ne.s32.totalorder %s49, %s51
      %p58 = scmp.eq.s32.totalorder %s20, 1
      %p59 = por %p57, %p58
      %p60 = scmp.ne.s32.totalorder %s51, %s52
      %p61 = scmp.eq.s32.totalorder %s20, 0
      %p62 = por %p60, %p61
      %p63 = scmp.ne.s32.totalorder %s51, %s52
      %p64 = scmp.eq.s32.totalorder %s21, 1
      %p65 = por %p63, %p64
      %p67 = scmp.ne.s32.totalorder %s52, %s66
      %p68 = scmp.eq.s32.totalorder %s21, 0
      %p69 = por %p67, %p68
      %s70 = ssub.s32 %s15, %s22
      %p71 = scmp.eq.s32.totalorder %s70, 0
      %s73 = sadd.s32 %s72, 1
      %s74 = scalar_select %p71, %s72, %s73
      %p77 = pneg %p71
      %p78 = scmp.eq.s32.totalorder %s15, 1
      %p79 = por %p77, %p78
      %p80 = scmp.ne.s32.totalorder %s72, %s75
      %p81 = scmp.eq.s32.totalorder %s15, 0
      %p82 = por %p80, %p81
      %p83 = scmp.ne.s32.totalorder %s72, %s75
      %p84 = scmp.eq.s32.totalorder %s20, 1
      %p85 = por %p83, %p84
      %p86 = scmp.ne.s32.totalorder %s75, %s76
      %p87 = scmp.eq.s32.totalorder %s20, 0
      %p88 = por %p86, %p87
      %p89 = scmp.ne.s32.totalorder %s75, %s76
      %p90 = scmp.eq.s32.totalorder %s21, 1
      %p91 = por %p89, %p90
      %p93 = scmp.ne.s32.totalorder %s76, %s92
      %p94 = scmp.eq.s32.totalorder %s21, 0
      %p95 = por %p93, %p94
      %p96 = scmp.le.s32.totalorder 1, %s15
      %p97 = scmp.lt.s32.totalorder %s15, 3
      %p98 = pnand %p96, %p97
      %p99 = pneg %p98
      // Predicated region
      $region9: #{tpu_custom_call.1} parent=5 // pred_check
        _
      $region10: #{tpu_custom_call.1} parent=5 // pred_check_branch
        %101 = sbr.rel (%p98) target = $region12
      $region11: #{tpu_custom_call.1} parent=5 // pred_region
        %s102 = ssub.s32 %s15, 1
        // Predicated region
        $region13: #{tpu_custom_call.1} parent=11 // pred_check
          %p103 = pneg %p62
        $region14: #{tpu_custom_call.1} parent=11 // pred_check_branch
          %105 = sbr.rel (%p103) target = $region16
        $region15: #{tpu_custom_call.1} parent=11 // pred_region
          %s107 = ssub.s32 256, 256
          %108 = vsyncadd [#allocation6], %s107
          %s109 = sshll.u32 [#allocation5], 4
          %s110 = int_to_ptr.vmem [resolvable:$true] %s109
          %115 = dma.hbm_to_vmem [thread:$0]  %s1, 256, %s110, [#allocation6], 64, 64, 4
        $region16: #{tpu_custom_call.1} parent=11 // pred_fallthru
          _
      $region12: #{tpu_custom_call.1} parent=5 // pred_fallthru
        _
      %p116 = scmp.lt.s32.totalorder %s15, 2
      // Predicated region
      $region17: #{tpu_custom_call.1} parent=5 // pred_check
        %p117 = pneg %p116
      $region18: #{tpu_custom_call.1} parent=5 // pred_check_branch
        %119 = sbr.rel (%p117) target = $region20
      $region19: #{tpu_custom_call.1} parent=5 // pred_region
        // Predicated region
        $region21: #{tpu_custom_call.1} parent=19 // pred_check
          %p120 = pneg %p35
        $region22: #{tpu_custom_call.1} parent=19 // pred_check_branch
          %122 = sbr.rel (%p120) target = $region24
        $region23: #{tpu_custom_call.1} parent=19 // pred_region
          %s123 = sand.u32 %s25, 1
          %s124 = scalar_lea.sflag [#allocation3], %s123
          %s125 = sand.u32 %s25, 1
          %s126 = smul.addr %s125, 8
          %s127 = scalar_lea.vmem [#allocation2], %s126
          %s129 = ssub.s32 128, 128
          %130 = vsyncadd %s124, %s129
          %s131 = smul.addr %s15, 128
          %s132 = scalar_lea.hbm %s0, %s131
          %s134 = sshll.u32 %s127, 4
          %s135 = int_to_ptr.vmem [resolvable:$true] %s134
          %137 = dma.hbm_to_vmem [thread:$0]  %s132, 128, %s135, %s124
        $region24: #{tpu_custom_call.1} parent=19 // pred_fallthru
          _
      $region20: #{tpu_custom_call.1} parent=5 // pred_fallthru
        _
      %p138 = scmp.le.s32.totalorder 1, %s15
      %p139 = scmp.lt.s32.totalorder %s15, 3
      %p140 = pnand %p138, %p139
      %p141 = pneg %p140
      // Predicated region
      $region25: #{tpu_custom_call.1} parent=5 // pred_check
        _
      $region26: #{tpu_custom_call.1} parent=5 // pred_check_branch
        %143 = sbr.rel (%p140) target = $region28
      $region27: #{tpu_custom_call.1} parent=5 // pred_region
        %s144 = ssub.s32 %s15, 1
        %s145 = sand.u32 %s28, 1
        %s146 = scalar_lea.sflag [#allocation3], %s145
        %s147 = sand.u32 %s28, 1
        %s148 = smul.addr %s147, 8
        %s149 = scalar_lea.vmem [#allocation2], %s148
        // Predicated region
        $region29: #{tpu_custom_call.1} parent=27 // pred_check
          %p150 = pneg %p41
        $region30: #{tpu_custom_call.1} parent=27 // pred_check_branch
          %152 = sbr.rel (%p150) target = $region32
        $region31: #{tpu_custom_call.1} parent=27 // pred_region
          %153 = dma.done %s146, 128
        $region32: #{tpu_custom_call.1} parent=27 // pred_fallthru
          _
        // Predicated region
        $region33: #{tpu_custom_call.1} parent=27 // pred_check
          %p154 = pneg %p62
        $region34: #{tpu_custom_call.1} parent=27 // pred_check_branch
          %156 = sbr.rel (%p154) target = $region36
        $region35: #{tpu_custom_call.1} parent=27 // pred_region
          %157 = dma.done [#allocation6], 256
        $region36: #{tpu_custom_call.1} parent=27 // pred_fallthru
          _
        %s158 = sand.u32 %s28, 1
        %s159 = scalar_lea.sflag [#allocation3], %s158
        %s160 = sand.u32 %s28, 1
        %s161 = smul.addr %s160, 8
        %s162 = scalar_lea.vmem [#allocation2], %s161
        %p163 = pneg %p41
        %p164 = pneg %p38
        %p165 = pneg %p62
        %p166 = pneg %p59
        %p167 = pneg %p88
        %p168 = pneg %p85
        %s169 = sand.u32 %s75, 1
        %s170 = scalar_lea.sflag [#allocation4], %s169
        %s171 = sand.u32 %s75, 1
        %s172 = smul.addr %s171, 8
        %s173 = scalar_lea.vmem [#allocation7], %s172
        %v175 = vld [vmem:[%s149] sm:$0xff]
        %v176 = vpack.c.bf16 %v175, %v175
        %v177 = vld [vmem:[#allocation5] sm:$0xf]
        %v178 = vld [vmem:[#allocation5 + $0x4] sm:$0xf]
        %v179 = vld [vmem:[#allocation5 + $0x8] sm:$0xf]
        %v180 = vld [vmem:[#allocation5 + $0xc] sm:$0xf]
        %v185 = vunpack.c.l.b16 %v177
        %v186 = vunpack.c.l.b16 %v178
        %v187 = vunpack.c.l.b16 %v179
        %v188 = vunpack.c.l.b16 %v180
        %v189 = vpack.c.b16 %v186, %v185
        %v190 = vpack.c.b16 %v188, %v187
        %vm193 = vcmask 261120
        %v195 = vsel %vm193, %v176, 0
        %197 = vmatprep.subr.bf16.mxu0 0
        %198 = vmatpush1.bf16.msra.mxu0 %v189
        %199 = vmatprep.subr.bf16.mxu0 0
        %200 = vmatpush1.bf16.msra.mxu0 %v190
        %201 = vmatprep.subr.bf16.mxu0 0
        %202 = vmatpush1.bf16.msra.mxu0 0
        %203 = vmatprep.subr.bf16.mxu0 0
        %204 = vmatpush1.bf16.msra.mxu0 0
        %205 = vmatprep.subr.bf16.mxu0 0
        %206 = vmatpush1.bf16.msra.mxu0 0
        %207 = vmatprep.subr.bf16.mxu0 0
        %208 = vmatpush1.bf16.msra.mxu0 0
        %209 = vmatprep.subr.bf16.mxu0 0
        %210 = vmatpush1.bf16.msra.mxu0 0
        %211 = vmatprep.subr.bf16.mxu0 0
        %212 = vmatpush1.bf16.msra.mxu0 0
        %213 = vmatprep.subr.bf16.mxu0 0
        %214 = vmatpush1.bf16.msra.mxu0 0
        %215 = vmatprep.subr.bf16.mxu0 0
        %216 = vmatpush1.bf16.msra.mxu0 0
        %217 = vmatprep.subr.bf16.mxu0 0
        %218 = vmatpush1.bf16.msra.mxu0 0
        %219 = vmatprep.subr.bf16.mxu0 0
        %220 = vmatpush1.bf16.msra.mxu0 0
        %221 = vmatprep.subr.bf16.mxu0 0
        %222 = vmatpush1.bf16.msra.mxu0 0
        %223 = vmatprep.subr.bf16.mxu0 0
        %224 = vmatpush1.bf16.msra.mxu0 0
        %225 = vmatprep.subr.bf16.mxu0 0
        %226 = vmatpush1.bf16.msra.mxu0 0
        %227 = vmatprep.subr.bf16.mxu0 0
        %228 = vmatpush1.bf16.msra.mxu0 0
        %229 = vmatprep.mubr.bf16.mxu0 0
        %230 = vmatmul.mubr.bf16.gmra.mrb[0].mxu0 %v195
        %v231 = vpop.f32.mrb[0].mxu0
        %v232 = vadd.f32 0.0, %v231
        %v233 = vpop.f32.mrb[0].mxu0
        %v234 = vpop.f32.mrb[0].mxu0
        %v235 = vpop.f32.mrb[0].mxu0
        %236 = vdwg.mxu0
        %237 = vst [vmem:[%s173] sm:$0xff] %v232
        %s238 = sand.u32 %s75, 1
        %s239 = scalar_lea.sflag [#allocation4], %s238
        %s240 = sand.u32 %s75, 1
        %s241 = smul.addr %s240, 8
        %s242 = scalar_lea.vmem [#allocation7], %s241
        // Predicated region
        $region37: #{tpu_custom_call.1} parent=27 // pred_check
          %p243 = pneg %p85
        $region38: #{tpu_custom_call.1} parent=27 // pred_check_branch
          %245 = sbr.rel (%p243) target = $region40
        $region39: #{tpu_custom_call.1} parent=27 // pred_region
          %s247 = ssub.s32 128, 128
          %248 = vsyncadd %s239, %s247
          %s249 = smul.addr %s20, 128
          %s250 = scalar_lea.hbm %s2, %s249
          %s252 = sshll.u32 %s242, 4
          %s253 = int_to_ptr.vmem [resolvable:$true] %s252
          %255 = dma.vmem_to_hbm [thread:$0]  %s253, 128, %s250, %s239
        $region40: #{tpu_custom_call.1} parent=27 // pred_fallthru
          _
      $region28: #{tpu_custom_call.1} parent=5 // pred_fallthru
        _
      %p256 = scmp.le.s32.totalorder 2, %s15
      // Predicated region
      $region41: #{tpu_custom_call.1} parent=5 // pred_check
        %p257 = pneg %p256
      $region42: #{tpu_custom_call.1} parent=5 // pred_check_branch
        %259 = sbr.rel (%p257) target = $region44
      $region43: #{tpu_custom_call.1} parent=5 // pred_region
        %s260 = ssub.s32 %s15, 2
        // Predicated region
        $region45: #{tpu_custom_call.1} parent=43 // pred_check
          %p261 = pneg %p91
        $region46: #{tpu_custom_call.1} parent=43 // pred_check_branch
          %263 = sbr.rel (%p261) target = $region48
        $region47: #{tpu_custom_call.1} parent=43 // pred_region
          %s264 = sand.u32 %s76, 1
          %s265 = scalar_lea.sflag [#allocation4], %s264
          %s266 = sand.u32 %s76, 1
          %s267 = smul.addr %s266, 8
          %s268 = scalar_lea.vmem [#allocation7], %s267
          %269 = dma.done %s265, 128
        $region48: #{tpu_custom_call.1} parent=43 // pred_fallthru
          _
      $region44: #{tpu_custom_call.1} parent=5 // pred_fallthru
        _
    $region6: #{tpu_custom_call.1} parent=1 // loop_footer
      %s19 = sadd.s32 1, %s15
    $region7: #{tpu_custom_call.1} parent=1 // loop_footer_branch
      %14 = sbr.rel target = $region3
    $region8: #{tpu_custom_call.1} parent=1 // loop_exit
      _
    %270 = vsyncpa [#allocation3], 1
    %s271 = scalar_lea.sflag [#allocation3], 1
    %272 = vsyncpa %s271, 1
    %273 = vsyncpa [#allocation6], 1
    %274 = vsyncpa [#allocation4], 1
    %s275 = scalar_lea.sflag [#allocation4], 1
    %276 = vsyncpa %s275, 1

</llo_original>
